<compile_context>
chip_gen: v5e
topology: v5e:2x2
jax: 0.10.0
libtpu: 0.0.40
codegen_flags: <defaults>
</compile_context>

<pallas_src>
import math
import re
import functools

import jax
import jax.numpy as jnp
from jax.experimental import pallas as pl
from jax.experimental.pallas import tpu as pltpu


# ----------------------------------------------------------------------------- helpers
def _round_up(x, m):
    return (x + m - 1) // m * m


def _cdiv(a, b):
    return (a + b - 1) // b


def _divisor_tile(total, limit, align):
    """Largest multiple of `align` that divides `total` and is <= limit (>= align)."""
    limit = max(align, min(limit, total))
    best = align
    for t in range(align, limit + 1, align):
        if total % t == 0:
            best = t
    return best


def _tpu_config():
    """Per-generation tiling / VMEM configuration (conservative fallback if unknown)."""
    gen = None
    try:
        kind = jax.devices()[0].device_kind.lower()
        m = re.search(r"(?:v|tpu)\s*(\d+)", kind)
        if m:
            gen = int(m.group(1))
    except Exception:
        gen = None

    vmem_phys = None
    try:
        vmem_phys = int(pltpu.get_tpu_info().vmem_capacity_bytes)
    except Exception:
        vmem_phys = None

    if gen is not None and gen >= 7:
        # v7x: 64 MiB VMEM/TC, 2 TCs/chip, 2x256x256 MXU -> leave headroom below 64 MiB.
        phys = vmem_phys or (64 << 20)
        cap = min(52 << 20, int(0.82 * phys))
        align, default_tm, cores = 256, 512, 2
    elif gen == 6:
        phys = vmem_phys or (128 << 20)
        cap = min(100 << 20, int(0.82 * phys))
        align, default_tm, cores = 256, 512, 1
    elif gen == 5:
        phys = vmem_phys or (128 << 20)
        cap = min(100 << 20, int(0.82 * phys))
        align, default_tm, cores = 128, 512, 1
    else:
        phys = vmem_phys or (64 << 20)
        cap = min(64 << 20, int(0.82 * phys))
        align, default_tm, cores = 128, 512, 1
    return dict(generation=gen, vmem_cap=cap, align=align,
                default_tm=default_tm, num_cores=cores)


def _gelu_erf(x):
    # Exact (erf-based) GELU in f32, matching the PyTorch reference implementation.
    return 0.5 * x * (1.0 + jax.lax.erf(x * (1.0 / math.sqrt(2.0))))


# ----------------------------------------------------------------------------- kernel
def ffn_kernel(x_ref, w1_ref, b1_ref, w2_ref, b2_ref, o_ref, acc_ref, *,
               gelu_activation, approx_gelu):
    # x_ref : (tm, in_p)  bf16     w1_ref: (in_p, tk) bf16    b1_ref: (1, tk) f32
    # w2_ref: (tk, tn)    bf16     b2_ref: (1, tn)    f32
    # o_ref : (tm, tn)    out dt   acc_ref: (tm, tn)  f32 scratch
    k = pl.program_id(2)

    @pl.when(k == 0)
    def _():
        # Initialize accumulator with the second bias (broadcast over rows).
        acc_ref[...] = jnp.broadcast_to(b2_ref[...], acc_ref.shape)

    # First matmul on the MXU: bf16 operands, f32 accumulation.
    h = jnp.dot(x_ref[...], w1_ref[...], preferred_element_type=jnp.float32)
    h = h + b1_ref[...]
    if gelu_activation:
        if approx_gelu:
            # tanh-approx GELU: routed to the EUP slot (frees the f32 VALU on v6e/v7x),
            # slight deviation from the exact erf GELU.
            h = jax.nn.gelu(h, approximate=True)
        else:
            h = _gelu_erf(h)          # exact erf GELU (matches PyTorch)
    else:
        h = jnp.maximum(h, 0.0)
    # Second matmul, accumulate in f32.
    acc_ref[...] += jnp.dot(h.astype(w2_ref.dtype), w2_ref[...],
                            preferred_element_type=jnp.float32)

    @pl.when(k == pl.num_programs(2) - 1)
    def _():
        # Dropout: F.dropout in eval mode is the identity; we run eval mode here.
        # TODO(synk): training-mode dropout would use pltpu.prng_seed/prng_random_bits.
        o_ref[...] = acc_ref[...].astype(o_ref.dtype)


# ----------------------------------------------------------------------------- weight prep (hoisted)
def prepare_params(w1, b1, w2, b2, *, compute_dtype=jnp.bfloat16, align=None):
    """Pad + cast the weights ONCE (hoisted out of the per-call path).

    w1: [in_dim, hidden], b1: [hidden], w2: [hidden, out_dim], b2: [out_dim]
    (weights already transposed from PyTorch's [out, in] layout).
    """
    if align is None:
        align = _tpu_config()["align"]
    in_dim, hidden = w1.shape
    out_dim = w2.shape[1]
    in_p = _round_up(in_dim, align)
    hid_p = _round_up(hidden, align)
    out_p = _round_up(out_dim, align)
    w1p = jnp.pad(w1.astype(compute_dtype), ((0, in_p - in_dim), (0, hid_p - hidden)))
    w2p = jnp.pad(w2.astype(compute_dtype), ((0, hid_p - hidden), (0, out_p - out_dim)))
    b1p = jnp.pad(b1.astype(jnp.float32), (0, hid_p - hidden)).reshape(1, hid_p)
    b2p = jnp.pad(b2.astype(jnp.float32), (0, out_p - out_dim)).reshape(1, out_p)
    return dict(w1=w1p, b1=b1p, w2=w2p, b2=b2p,
                in_dim=in_dim, hidden=hidden, out_dim=out_dim)


# ----------------------------------------------------------------------------- wrapper
def transformer_ffn(x, params, *, gelu_activation=True, approx_gelu=False,
                    tm=None, tk=None, tn=None, compute_dtype=jnp.bfloat16):
    """x: [..., in_dim] -> [..., out_dim].  `params` comes from prepare_params()."""
    cfg = _tpu_config()
    align = cfg["align"]

    w1p, b1p, w2p, b2p = params["w1"], params["b1"], params["w2"], params["b2"]
    in_dim, hidden, out_dim = params["in_dim"], params["hidden"], params["out_dim"]
    in_p, hid_p = w1p.shape
    out_p = w2p.shape[1]

    lead = x.shape[:-1]
    M = int(math.prod(lead)) if lead else 1
    out_dtype = x.dtype
    cb = jnp.dtype(compute_dtype).itemsize
    ob = jnp.dtype(out_dtype).itemsize
    min_sub = 16 if cb == 2 else 8

    # ---- row tile ----
    if tm is None:
        tm = cfg["default_tm"]
    tm = max(min_sub, min(_round_up(tm, min_sub), _round_up(M, min_sub)))
    if cfg["num_cores"] >= 2:
        # v7x: keep >=2 i steps whenever possible so both TensorCores get work.
        while tm > min_sub and _cdiv(M, tm) < 2:
            tm = max(min_sub, _round_up(tm // 2, min_sub))

    # ---- hidden / output tiles: resident weights by default ----
    tk = _divisor_tile(hid_p, hid_p if tk is None else tk, align)
    tn = _divisor_tile(out_p, out_p if tn is None else tn, align)

    # ---- shrink tiles until the (double-buffered) working set fits the VMEM budget ----
    def vmem_bytes(tm_, tk_, tn_):
        return (2 * tm_ * in_p * cb          # x tile
                + 2 * in_p * tk_ * cb        # W1 tile
                + 2 * 8 * tk_ * 4            # b1 tile (sublane-padded)
                + 2 * tk_ * tn_ * cb         # W2 tile
                + 2 * 8 * tn_ * 4            # b2 tile
                + 2 * tm_ * tn_ * ob         # output tile
                + tm_ * tn_ * 4)             # f32 accumulator scratch

    budget = int(0.85 * cfg["vmem_cap"])
    for _ in range(64):
        if vmem_bytes(tm, tk, tn) <= budget:
            break
        if tk > max(align, 512):
            tk = _divisor_tile(hid_p, tk // 2, align)
        elif tm > 256:
            tm = max(min_sub, _round_up(tm // 2, min_sub))
        elif tn > max(align, 2048):
            tn = _divisor_tile(out_p, tn // 2, align)
        elif tk > align:
            tk = _divisor_tile(hid_p, tk // 2, align)
        elif tn > align:
            tn = _divisor_tile(out_p, tn // 2, align)
        elif tm > min_sub:
            tm = max(min_sub, _round_up(tm // 2, min_sub))
        else:
            break

    M_p = _round_up(M, tm)
    n_i, n_j, n_k = M_p // tm, out_p // tn, hid_p // tk

    # ---- pack the activations (weights were prepared once outside) ----
    x2d = x.reshape(M, in_dim).astype(compute_dtype)
    if (M_p, in_p) != (M, in_dim):
        x2d = jnp.pad(x2d, ((0, M_p - M), (0, in_p - in_dim)))

    vmem_limit = int(min(cfg["vmem_cap"],
                         max(32 << 20, int(1.25 * vmem_bytes(tm, tk, tn)) + (2 << 20))))

    # ---- cost estimate (includes weight re-streaming while the k / j axes exist) ----
    w1_loads = 1 if n_k == 1 else n_i * n_j
    w2_loads = 1 if (n_k == 1 and n_j == 1) else n_i
    cost = pl.CostEstimate(
        flops=2 * M_p * (in_p * hid_p * n_j + hid_p * out_p),
        transcendentals=(M_p * hid_p * n_j) if gelu_activation else 0,
        bytes_accessed=(M_p * in_p * cb
                        + w1_loads * in_p * hid_p * cb
                        + w2_loads * hid_p * out_p * cb
                        + 8 * hid_p * 4 + 8 * out_p * 4
                        + M_p * out_p * ob),
    )

    kernel = functools.partial(ffn_kernel, gelu_activation=gelu_activation,
                               approx_gelu=approx_gelu)

    out2d = pl.pallas_call(
        kernel,
        out_shape=jax.ShapeDtypeStruct((M_p, out_p), out_dtype),
        grid_spec=pltpu.PrefetchScalarGridSpec(
            num_scalar_prefetch=0,
            grid=(n_i, n_j, n_k),                       # reduction axis (k) last
            in_specs=[
                pl.BlockSpec((tm, in_p), lambda i, j, k: (i, 0)),    # x row tile
                pl.BlockSpec((in_p, tk), lambda i, j, k: (0, k)),    # W1 (resident if n_k==1)
                pl.BlockSpec((1, tk),    lambda i, j, k: (0, k)),    # b1
                pl.BlockSpec((tk, tn),   lambda i, j, k: (k, j)),    # W2
                pl.BlockSpec((1, tn),    lambda i, j, k: (0, j)),    # b2
            ],
            out_specs=pl.BlockSpec((tm, tn), lambda i, j, k: (i, j)),
            scratch_shapes=[pltpu.VMEM((tm, tn), jnp.float32)],
        ),
        compiler_params=pltpu.CompilerParams(
            dimension_semantics=("parallel", "parallel", "arbitrary"),
            vmem_limit_bytes=vmem_limit),
        cost_estimate=cost,
    )(x2d, w1p, b1p, w2p, b2p)

    return out2d[:M, :out_dim].reshape(*lead, out_dim)


# ----------------------------------------------------------------------------- init / reference
def init_params(key, in_dim, dim_hidden, out_dim, dtype=jnp.float32):
    """Deterministic init mirroring nn.Linear's U(-1/sqrt(fan_in), 1/sqrt(fan_in)).

    Weights are returned already transposed to [in, out] layout for the kernel.
    """
    k1, k2, k3, k4 = jax.random.split(key, 4)
    lim1 = 1.0 / math.sqrt(in_dim)
    lim2 = 1.0 / math.sqrt(dim_hidden)
    w1 = jax.random.uniform(k1, (in_dim, dim_hidden), dtype, -lim1, lim1)
    b1 = jax.random.uniform(k2, (dim_hidden,), dtype, -lim1, lim1)
    w2 = jax.random.uniform(k3, (dim_hidden, out_dim), dtype, -lim2, lim2)
    b2 = jax.random.uniform(k4, (out_dim,), dtype, -lim2, lim2)
    return w1, b1, w2, b2


def _ref_ffn(x, w1, b1, w2, b2, gelu_activation=True, compute_dtype=jnp.bfloat16):
    """Pure-JAX reference with the same bf16-operand / f32-accumulate dtype flow."""
    xc = x.astype(compute_dtype)
    h = jnp.dot(xc, w1.astype(compute_dtype),
                preferred_element_type=jnp.float32) + b1.astype(jnp.float32)
    h = _gelu_erf(h) if gelu_activation else jnp.maximum(h, 0.0)
    y = jnp.dot(h.astype(compute_dtype), w2.astype(compute_dtype),
                preferred_element_type=jnp.float32) + b2.astype(jnp.float32)
    return y.astype(x.dtype)


if __name__ == "__main__":
    # Small shapes implied by the module: a batch of sequences of token vectors.
    B, S = 2, 8
    in_dim, dim_hidden, out_dim = 32, 64, 32
    dropout = 0.1            # identity in eval mode
    gelu_activation = True

    key = jax.random.PRNGKey(0)
    kx, kp = jax.random.split(key)
    x = jax.random.normal(kx, (B, S, in_dim), jnp.float32)
    w1, b1, w2, b2 = init_params(kp, in_dim, dim_hidden, out_dim)

    # Weight prep (pad + bf16 cast) done ONCE, outside the per-call path.
    params = prepare_params(w1, b1, w2, b2)

    out = transformer_ffn(x, params, gelu_activation=gelu_activation)
    out = jax.block_until_ready(out)

    # Sanity check against a pure-JAX reference with the same dtype flow.
    ref = _ref_ffn(x, w1, b1, w2, b2, gelu_activation)
    assert out.shape == (B, S, out_dim)
    assert jnp.allclose(out, ref, atol=2e-3, rtol=2e-3), "mismatch vs reference"

    print("KERNEL_OK")
</pallas_src>

<mosaic_0001>
module attributes {stable_mosaic.version = 11 : i64} {
  func.func @ffn_kernel(%arg0: i32, %arg1: i32, %arg2: i32, %arg3: memref<16x128xbf16, #tpu.memory_space<vmem>>, %arg4: memref<128x128xbf16, #tpu.memory_space<vmem>>, %arg5: memref<1x128xf32, #tpu.memory_space<vmem>>, %arg6: memref<128x128xbf16, #tpu.memory_space<vmem>>, %arg7: memref<1x128xf32, #tpu.memory_space<vmem>>, %arg8: memref<16x128xf32, #tpu.memory_space<vmem>>, %arg9: memref<16x128xf32, #tpu.memory_space<vmem>>) attributes {dimension_semantics = [#tpu.dimension_semantics<parallel>, #tpu.dimension_semantics<parallel>, #tpu.dimension_semantics<arbitrary>], iteration_bounds = array<i64: 1, 1, 1>, scalar_prefetch = 0 : i64, scratch_operands = 1 : i64, tpu.core_type = #tpu.core_type<tc>, window_params = [{transform_indices = @transform_0, window_bounds = array<i64: 16, 128>}, {transform_indices = @transform_1, window_bounds = array<i64: 128, 128>}, {transform_indices = @transform_2, window_bounds = array<i64: 1, 128>}, {transform_indices = @transform_3, window_bounds = array<i64: 128, 128>}, {transform_indices = @transform_4, window_bounds = array<i64: 1, 128>}, {transform_indices = @transform_5, window_bounds = array<i64: 16, 128>}]} {
    %c0_i32 = arith.constant 0 : i32
    %0 = arith.cmpi eq, %arg2, %c0_i32 : i32
    %1 = arith.extui %0 : i1 to i32
    %c0_i32_0 = arith.constant 0 : i32
    %2 = arith.cmpi ne, %1, %c0_i32_0 : i32
    scf.if %2 {
      %c0_18 = arith.constant 0 : index
      %c0_19 = arith.constant 0 : index
      %26 = vector.load %arg7[%c0_18, %c0_19] : memref<1x128xf32, #tpu.memory_space<vmem>>, vector<1x128xf32>
      %27 = vector.shape_cast %26 : vector<1x128xf32> to vector<1x128xf32>
      %28 = vector.broadcast %27 : vector<1x128xf32> to vector<16x128xf32>
      %c0_20 = arith.constant 0 : index
      %c0_21 = arith.constant 0 : index
      %29 = vector.load %arg9[%c0_20, %c0_21] : memref<16x128xf32, #tpu.memory_space<vmem>>, vector<16x128xf32>
      tpu.vector_store %arg9[%c0_20, %c0_21], %28 {strides = array<i32>} : memref<16x128xf32, #tpu.memory_space<vmem>>, vector<16x128xf32>,
    } else {
    }
    %c0 = arith.constant 0 : index
    %c0_1 = arith.constant 0 : index
    %3 = vector.load %arg3[%c0, %c0_1] : memref<16x128xbf16, #tpu.memory_space<vmem>>, vector<16x128xbf16>
    %c0_2 = arith.constant 0 : index
    %c0_3 = arith.constant 0 : index
    %4 = vector.load %arg4[%c0_2, %c0_3] : memref<128x128xbf16, #tpu.memory_space<vmem>>, vector<128x128xbf16>
    %cst = arith.constant dense<0.000000e+00> : vector<16x128xf32>
    %5 = tpu.matmul %3, %4, %cst {dimension_numbers = #tpu.dot_dimension_numbers<[1], [0], [0], [1], [0, 0, 1, 1], [], []>} : vector<16x128xbf16>, vector<128x128xbf16>, vector<16x128xf32> -> vector<16x128xf32>
    %c0_4 = arith.constant 0 : index
    %c0_5 = arith.constant 0 : index
    %6 = vector.load %arg5[%c0_4, %c0_5] : memref<1x128xf32, #tpu.memory_space<vmem>>, vector<1x128xf32>
    %7 = vector.broadcast %6 : vector<1x128xf32> to vector<16x128xf32>
    %8 = arith.addf %5, %7 : vector<16x128xf32>
    %cst_6 = arith.constant 5.000000e-01 : f32
    %9 = vector.broadcast %cst_6 : f32 to vector<16x128xf32>
    %10 = arith.mulf %9, %8 : vector<16x128xf32>
    %cst_7 = arith.constant 0.707106769 : f32
    %11 = vector.broadcast %cst_7 : f32 to vector<16x128xf32>
    %12 = arith.mulf %8, %11 : vector<16x128xf32>
    %13 = math.erf %12 : vector<16x128xf32>
    %cst_8 = arith.constant 1.000000e+00 : f32
    %14 = vector.broadcast %cst_8 : f32 to vector<16x128xf32>
    %15 = arith.addf %14, %13 : vector<16x128xf32>
    %16 = arith.mulf %10, %15 : vector<16x128xf32>
    %c0_9 = arith.constant 0 : index
    %c0_10 = arith.constant 0 : index
    %17 = vector.load %arg9[%c0_9, %c0_10] : memref<16x128xf32, #tpu.memory_space<vmem>>, vector<16x128xf32>
    %18 = arith.truncf %16 : vector<16x128xf32> to vector<16x128xbf16>
    %c0_11 = arith.constant 0 : index
    %c0_12 = arith.constant 0 : index
    %19 = vector.load %arg6[%c0_11, %c0_12] : memref<128x128xbf16, #tpu.memory_space<vmem>>, vector<128x128xbf16>
    %cst_13 = arith.constant dense<0.000000e+00> : vector<16x128xf32>
    %20 = tpu.matmul %18, %19, %cst_13 {dimension_numbers = #tpu.dot_dimension_numbers<[1], [0], [0], [1], [0, 0, 1, 1], [], []>} : vector<16x128xbf16>, vector<128x128xbf16>, vector<16x128xf32> -> vector<16x128xf32>
    %21 = arith.addf %17, %20 : vector<16x128xf32>
    %c0_14 = arith.constant 0 : index
    %c0_15 = arith.constant 0 : index
    %22 = vector.load %arg9[%c0_14, %c0_15] : memref<16x128xf32, #tpu.memory_space<vmem>>, vector<16x128xf32>
    tpu.vector_store %arg9[%c0_14, %c0_15], %21 {strides = array<i32>} : memref<16x128xf32, #tpu.memory_space<vmem>>, vector<16x128xf32>,
    %c0_i32_16 = arith.constant 0 : i32
    %23 = arith.cmpi eq, %arg2, %c0_i32_16 : i32
    %24 = arith.extui %23 : i1 to i32
    %c0_i32_17 = arith.constant 0 : i32
    %25 = arith.cmpi ne, %24, %c0_i32_17 : i32
    scf.if %25 {
      %c0_18 = arith.constant 0 : index
      %c0_19 = arith.constant 0 : index
      %26 = vector.load %arg9[%c0_18, %c0_19] : memref<16x128xf32, #tpu.memory_space<vmem>>, vector<16x128xf32>
      %c0_20 = arith.constant 0 : index
      %c0_21 = arith.constant 0 : index
      %27 = vector.load %arg8[%c0_20, %c0_21] : memref<16x128xf32, #tpu.memory_space<vmem>>, vector<16x128xf32>
      tpu.vector_store %arg8[%c0_20, %c0_21], %26 {strides = array<i32>} : memref<16x128xf32, #tpu.memory_space<vmem>>, vector<16x128xf32>,
    } else {
    }
    return
  }
  func.func @transform_0(%arg0: i32, %arg1: i32, %arg2: i32) -> (i32, i32) {
    %c0_i32 = arith.constant 0 : i32
    %c0_i32_0 = arith.constant 0 : i32
    return %arg0, %c0_i32 : i32, i32
  }
  func.func @transform_1(%arg0: i32, %arg1: i32, %arg2: i32) -> (i32, i32) {
    %c0_i32 = arith.constant 0 : i32
    %c0_i32_0 = arith.constant 0 : i32
    return %c0_i32, %arg2 : i32, i32
  }
  func.func @transform_2(%arg0: i32, %arg1: i32, %arg2: i32) -> (i32, i32) {
    %c0_i32 = arith.constant 0 : i32
    %c0_i32_0 = arith.constant 0 : i32
    return %c0_i32, %arg2 : i32, i32
  }
  func.func @transform_3(%arg0: i32, %arg1: i32, %arg2: i32) -> (i32, i32) {
    %c0_i32 = arith.constant 0 : i32
    return %arg2, %arg1 : i32, i32
  }
  func.func @transform_4(%arg0: i32, %arg1: i32, %arg2: i32) -> (i32, i32) {
    %c0_i32 = arith.constant 0 : i32
    %c0_i32_0 = arith.constant 0 : i32
    return %c0_i32, %arg1 : i32, i32
  }
  func.func @transform_5(%arg0: i32, %arg1: i32, %arg2: i32) -> (i32, i32) {
    %c0_i32 = arith.constant 0 : i32
    return %arg0, %arg1 : i32, i32
  }
}

</mosaic_0001>

<llo_original>
// kernel: tpu_custom_call.1
$region0: #{tpu_custom_call.1}
  #allocation0 [shape = 'u32[]', space=smem, size = 0x4, offset = 0x4, fixed_abs, tag = 'smem constant byte address 0x4 - core index']
  #allocation1 [shape = 'u32[72,128]{1,0:T(1,128)}', space=vmem, size = 0x9000, scoped, tag = 'internal scratch']
  #allocation2 [shape = 'f32[16,128]{1,0:T(8,128)}', space=vmem, size = 0x2000, scoped, tag = 'scratch operand']
  %s0 = inlined_call_operand.hbm [shape: bf16[16,128], index: 0, kind: input, shape index: {}]
  %s1 = inlined_call_operand.hbm [shape: bf16[128,128], index: 1, kind: input, shape index: {}]
  %s2 = inlined_call_operand.vmem [shape: f32[1,128], index: 2, kind: input, shape index: {}]
  %s3 = inlined_call_operand.hbm [shape: bf16[128,128], index: 3, kind: input, shape index: {}]
  %s4 = inlined_call_operand.vmem [shape: f32[1,128], index: 4, kind: input, shape index: {}]
  %s5 = inlined_call_operand.hbm [shape: f32[16,128], index: 5, kind: output, shape index: {}]
  %s6 = sld [smem:[#allocation0]]
  $region50: #{tpu_custom_call.1} parent=0
    _
  %s8 = ssub.s32 1, %s6
  %s9 = scalar_select 0, %s8, %s6
  $region1: #{tpu_custom_call.1} parent=0
    #allocation3 [shape = 'u8[4096]{0}', space=vmem, size = 0x1000, scoped, tag = 'input window, operand 0, single buffered']
    #allocation4 [shape = 's32[1]{0}', space=sflag, size = 0x4, scoped, tag = 'scoped memory for tpu_custom_call.1']
    #allocation5 [shape = 's32[1]{0}', space=sflag, size = 0x4, scoped, tag = 'scoped memory for tpu_custom_call.1']
    #allocation6 [shape = 'u8[32768]{0}', space=vmem, size = 0x8000, scoped, tag = 'input window, operand 1, single buffered']
    #allocation7 [shape = 's32[1]{0}', space=sflag, size = 0x4, scoped, tag = 'scoped memory for tpu_custom_call.1']
    #allocation8 [shape = 'u8[32768]{0}', space=vmem, size = 0x8000, scoped, tag = 'input window, operand 3, single buffered']
    #allocation9 [shape = 'u8[8192]{0}', space=vmem, size = 0x2000, scoped, tag = 'output window, operand 0, single buffered']
    %10 = vsyncpa [#allocation4], 0
    %11 = vsyncpa [#allocation7], 0
    %12 = vsyncpa [#allocation5], 0
    // Predicated region
    $region2: #{tpu_custom_call.1} parent=1 // pred_check
      _
    $region3: #{tpu_custom_call.1} parent=1 // pred_check_branch
      %14 = sbr.rel (0) target = $region5
    $region4: #{tpu_custom_call.1} parent=1 // pred_region
      %16 = vsyncadd [#allocation4], 0
      %s17 = sshll.u32 %s0, 4
      %s18 = int_to_ptr.hbm [resolvable:$true] %s17
      %s19 = sshll.u32 [#allocation3], 4
      %s20 = int_to_ptr.vmem [resolvable:$true] %s19
      %25 = dma.hbm_to_vmem [thread:$0]  %s18, 128, %s20, [#allocation4], 64, 64, 4
    $region5: #{tpu_custom_call.1} parent=1 // pred_fallthru
      _
    // Predicated region
    $region6: #{tpu_custom_call.1} parent=1 // pred_check
      _
    $region7: #{tpu_custom_call.1} parent=1 // pred_check_branch
      %27 = sbr.rel (0) target = $region9
    $region8: #{tpu_custom_call.1} parent=1 // pred_region
      %29 = vsyncadd [#allocation7], 0
      %s30 = sshll.u32 %s1, 4
      %s31 = int_to_ptr.hbm [resolvable:$true] %s30
      %s32 = sshll.u32 [#allocation6], 4
      %s33 = int_to_ptr.vmem [resolvable:$true] %s32
      %38 = dma.hbm_to_vmem [thread:$0]  %s31, 1024, %s33, [#allocation7], 64, 64, 4
    $region9: #{tpu_custom_call.1} parent=1 // pred_fallthru
      _
    // Predicated region
    $region10: #{tpu_custom_call.1} parent=1 // pred_check
      _
    $region11: #{tpu_custom_call.1} parent=1 // pred_check_branch
      %40 = sbr.rel (0) target = $region13
    $region12: #{tpu_custom_call.1} parent=1 // pred_region
      _
    $region13: #{tpu_custom_call.1} parent=1 // pred_fallthru
      _
    // Predicated region
    $region14: #{tpu_custom_call.1} parent=1 // pred_check
      _
    $region15: #{tpu_custom_call.1} parent=1 // pred_check_branch
      %42 = sbr.rel (0) target = $region17
    $region16: #{tpu_custom_call.1} parent=1 // pred_region
      %44 = vsyncadd [#allocation7], 0
      %s45 = sshll.u32 %s3, 4
      %s46 = int_to_ptr.hbm [resolvable:$true] %s45
      %s47 = sshll.u32 [#allocation8], 4
      %s48 = int_to_ptr.vmem [resolvable:$true] %s47
      %53 = dma.hbm_to_vmem [thread:$0]  %s46, 1024, %s48, [#allocation7], 64, 64, 4
    $region17: #{tpu_custom_call.1} parent=1 // pred_fallthru
      _
    // Predicated region
    $region18: #{tpu_custom_call.1} parent=1 // pred_check
      _
    $region19: #{tpu_custom_call.1} parent=1 // pred_check_branch
      %55 = sbr.rel (0) target = $region21
    $region20: #{tpu_custom_call.1} parent=1 // pred_region
      _
    $region21: #{tpu_custom_call.1} parent=1 // pred_fallthru
      _
    // Predicated region
    $region22: #{tpu_custom_call.1} parent=1 // pred_check
      _
    $region23: #{tpu_custom_call.1} parent=1 // pred_check_branch
      %57 = sbr.rel (0) target = $region25
    $region24: #{tpu_custom_call.1} parent=1 // pred_region
      %59 = dma.done [#allocation4], 128
    $region25: #{tpu_custom_call.1} parent=1 // pred_fallthru
      _
    // Predicated region
    $region26: #{tpu_custom_call.1} parent=1 // pred_check
      _
    $region27: #{tpu_custom_call.1} parent=1 // pred_check_branch
      %61 = sbr.rel (0) target = $region29
    $region28: #{tpu_custom_call.1} parent=1 // pred_region
      %63 = dma.done [#allocation7], 1024
    $region29: #{tpu_custom_call.1} parent=1 // pred_fallthru
      _
    // Predicated region
    $region30: #{tpu_custom_call.1} parent=1 // pred_check
      _
    $region31: #{tpu_custom_call.1} parent=1 // pred_check_branch
      %65 = sbr.rel (0) target = $region33
    $region32: #{tpu_custom_call.1} parent=1 // pred_region
      %67 = dma.done [#allocation7], 1024
    $region33: #{tpu_custom_call.1} parent=1 // pred_fallthru
      _
    %p68 = scmp.eq.s32.totalorder 0, 0
    // Predicated region
    $region34: #{tpu_custom_call.1} parent=1 // pred_check
      %p69 = pneg %p68
    $region35: #{tpu_custom_call.1} parent=1 // pred_check_branch
      %71 = sbr.rel (%p69) target = $region37
    $region36: #{tpu_custom_call.1} parent=1 // pred_region
      %v72 = vld [vmem:[%s4] sm:$0x1]
      %v74 = vperm.slane %v72, 0
      %76 = vst [vmem:[#allocation2] sm:$0xff] %v74
      %77 = vst [vmem:[#allocation2 + $0x8] sm:$0xff] %v74
    $region37: #{tpu_custom_call.1} parent=1 // pred_fallthru
      _
    %v78 = vld [vmem:[#allocation3] sm:$0xf]
    %v79 = vld [vmem:[#allocation3 + $0x4] sm:$0xf]
    %v80 = vld [vmem:[#allocation6] sm:$0xf]
    %v81 = vld [vmem:[#allocation6 + $0x4] sm:$0xf]
    %v82 = vld [vmem:[#allocation6 + $0x8] sm:$0xf]
    %v83 = vld [vmem:[#allocation6 + $0xc] sm:$0xf]
    %v84 = vld [vmem:[#allocation6 + $0x10] sm:$0xf]
    %v85 = vld [vmem:[#allocation6 + $0x14] sm:$0xf]
    %v86 = vld [vmem:[#allocation6 + $0x18] sm:$0xf]
    %v87 = vld [vmem:[#allocation6 + $0x1c] sm:$0xf]
    %v88 = vld [vmem:[#allocation6 + $0x20] sm:$0xf]
    %v89 = vld [vmem:[#allocation6 + $0x24] sm:$0xf]
    %v90 = vld [vmem:[#allocation6 + $0x28] sm:$0xf]
    %v91 = vld [vmem:[#allocation6 + $0x2c] sm:$0xf]
    %v92 = vld [vmem:[#allocation6 + $0x30] sm:$0xf]
    %v93 = vld [vmem:[#allocation6 + $0x34] sm:$0xf]
    %v94 = vld [vmem:[#allocation6 + $0x38] sm:$0xf]
    %v95 = vld [vmem:[#allocation6 + $0x3c] sm:$0xf]
    %v96 = vld [vmem:[%s2] sm:$0x1]
    %v98 = vperm.slane %v96, 0
    %v102 = vunpack.c.l.b16 %v78
    %v103 = vunpack.c.l.b16 %v79
    %v104 = vpack.c.b16 %v103, %v102
    %v122 = vunpack.c.l.b16 %v80
    %v123 = vunpack.c.l.b16 %v81
    %v124 = vunpack.c.l.b16 %v82
    %v125 = vunpack.c.l.b16 %v83
    %v126 = vunpack.c.l.b16 %v84
    %v127 = vunpack.c.l.b16 %v85
    %v128 = vunpack.c.l.b16 %v86
    %v129 = vunpack.c.l.b16 %v87
    %v130 = vunpack.c.l.b16 %v88
    %v131 = vunpack.c.l.b16 %v89
    %v132 = vunpack.c.l.b16 %v90
    %v133 = vunpack.c.l.b16 %v91
    %v134 = vunpack.c.l.b16 %v92
    %v135 = vunpack.c.l.b16 %v93
    %v136 = vunpack.c.l.b16 %v94
    %v137 = vunpack.c.l.b16 %v95
    %v138 = vpack.c.b16 %v123, %v122
    %v139 = vpack.c.b16 %v125, %v124
    %v140 = vpack.c.b16 %v127, %v126
    %v141 = vpack.c.b16 %v129, %v128
    %v142 = vpack.c.b16 %v131, %v130
    %v143 = vpack.c.b16 %v133, %v132
    %v144 = vpack.c.b16 %v135, %v134
    %v145 = vpack.c.b16 %v137, %v136
    %154 = vmatpush.bf16.msra.mxu0 %v145
    %155 = vmatpush.bf16.msra.mxu0 %v144
    %156 = vmatpush.bf16.msra.mxu0 %v143
    %157 = vmatpush.bf16.msra.mxu0 %v142
    %158 = vmatpush.bf16.msra.mxu0 %v141
    %159 = vmatpush.bf16.msra.mxu0 %v140
    %160 = vmatpush.bf16.msra.mxu0 %v139
    %161 = vmatpush.bf16.msra.mxu0 %v138
    %162 = vmatmul.bf16.gmra.mxu0 %v104
    %v163 = vpop.f32.mrf.mxu0
    %v164 = vadd.f32 %v98, %v163
    %v165 = vpop.f32.mrf.mxu0
    %v166 = vadd.f32 %v98, %v165
    %167 = vdwg.mxu0
    %v168 = vmul.f32 %v164, 0.5
    %v169 = vmul.f32 %v166, 0.5
    %v170 = vmul.f32 %v164, 0.70710677
    %v171 = vmul.f32 %v166, 0.70710677
    %v172 = vmul.f32 %v170, %v170
    %v173 = vmin.f32 16.0, %v172
    %v174 = vmul.f32 %v173, 2.1237322e-06
    %v175 = vadd.f32 %v174, 0.00028619796
    %v176 = vmul.f32 %v173, %v175
    %v177 = vadd.f32 %v176, 0.0036580483
    %v178 = vmul.f32 %v173, %v177
    %v179 = vadd.f32 %v178, 0.05243302
    %v180 = vmul.f32 %v173, %v179
    %v181 = vadd.f32 %v180, 0.18741608
    %v182 = vmul.f32 %v173, %v181
    %v183 = vadd.f32 %v182, 1.1283791
    %v184 = vmul.f32 %v170, %v183
    %v185 = vmul.f32 %v173, 3.8918573e-05
    %v186 = vadd.f32 %v185, 0.001143296
    %v187 = vmul.f32 %v173, %v186
    %v188 = vadd.f32 %v187, 0.014752088
    %v189 = vmul.f32 %v173, %v188
    %v190 = vadd.f32 %v189, 0.112945676
    %v191 = vmul.f32 %v173, %v190
    %v192 = vadd.f32 %v191, 0.4994258
    %v193 = vmul.f32 %v173, %v192
    %v194 = vadd.f32 %v193, 1.0
    %v195 = vrcp.pop %v194
    %v196 = vmul.f32 %v194, %v195
    %v197 = vsub.f32 1.0, %v196
    %v198 = vmul.f32 %v195, %v197
    %v199 = vadd.f32 %v195, %v198
    %vm200 = vweird.f32 %v194
    %vm201 = vweird.f32 %v195
    %vm202 = vmor %vm200, %vm201
    %v203 = vsel %vm202, %v195, %v199
    %v204 = vand.u32 2147483647, %v194
    %vm205 = vcmp.eq.f32.partialorder %v204, 8.507059e+37
    %v206 = vand.u32 %v194, 2147483648
    %v207 = vor.u32 1.1754944e-38, %v206
    %v208 = vsel %vm205, %v207, %v203
    %v209 = vmul.f32 %v184, %v208
    %v210 = vmin.f32 %v209, 1.0
    %v211 = vmax.f32 %v210, -1.0
    %v212 = vmul.f32 %v171, %v171
    %v213 = vmin.f32 16.0, %v212
    %v214 = vmul.f32 %v213, 2.1237322e-06
    %v215 = vadd.f32 %v214, 0.00028619796
    %v216 = vmul.f32 %v213, %v215
    %v217 = vadd.f32 %v216, 0.0036580483
    %v218 = vmul.f32 %v213, %v217
    %v219 = vadd.f32 %v218, 0.05243302
    %v220 = vmul.f32 %v213, %v219
    %v221 = vadd.f32 %v220, 0.18741608
    %v222 = vmul.f32 %v213, %v221
    %v223 = vadd.f32 %v222, 1.1283791
    %v224 = vmul.f32 %v171, %v223
    %v225 = vmul.f32 %v213, 3.8918573e-05
    %v226 = vadd.f32 %v225, 0.001143296
    %v227 = vmul.f32 %v213, %v226
    %v228 = vadd.f32 %v227, 0.014752088
    %v229 = vmul.f32 %v213, %v228
    %v230 = vadd.f32 %v229, 0.112945676
    %v231 = vmul.f32 %v213, %v230
    %v232 = vadd.f32 %v231, 0.4994258
    %v233 = vmul.f32 %v213, %v232
    %v234 = vadd.f32 %v233, 1.0
    %v235 = vrcp.pop %v234
    %v236 = vmul.f32 %v234, %v235
    %v237 = vsub.f32 1.0, %v236
    %v238 = vmul.f32 %v235, %v237
    %v239 = vadd.f32 %v235, %v238
    %vm240 = vweird.f32 %v234
    %vm241 = vweird.f32 %v235
    %vm242 = vmor %vm240, %vm241
    %v243 = vsel %vm242, %v235, %v239
    %v244 = vand.u32 2147483647, %v234
    %vm245 = vcmp.eq.f32.partialorder %v244, 8.507059e+37
    %v246 = vand.u32 %v234, 2147483648
    %v247 = vor.u32 1.1754944e-38, %v246
    %v248 = vsel %vm245, %v247, %v243
    %v249 = vmul.f32 %v224, %v248
    %v250 = vmin.f32 %v249, 1.0
    %v251 = vmax.f32 %v250, -1.0
    %v252 = vadd.f32 %v211, 1.0
    %v253 = vadd.f32 %v251, 1.0
    %v254 = vmul.f32 %v168, %v252
    %v255 = vmul.f32 %v169, %v253
    %v256 = vld [vmem:[#allocation2] sm:$0xff]
    %v257 = vld [vmem:[#allocation2 + $0x8] sm:$0xff]
    %v258 = vpack.c.bf16 %v255, %v254
    %v259 = vld [vmem:[#allocation8] sm:$0xf]
    %v260 = vld [vmem:[#allocation8 + $0x4] sm:$0xf]
    %v261 = vld [vmem:[#allocation8 + $0x8] sm:$0xf]
    %v262 = vld [vmem:[#allocation8 + $0xc] sm:$0xf]
    %v263 = vld [vmem:[#allocation8 + $0x10] sm:$0xf]
    %v264 = vld [vmem:[#allocation8 + $0x14] sm:$0xf]
    %v265 = vld [vmem:[#allocation8 + $0x18] sm:$0xf]
    %v266 = vld [vmem:[#allocation8 + $0x1c] sm:$0xf]
    %v267 = vld [vmem:[#allocation8 + $0x20] sm:$0xf]
    %v268 = vld [vmem:[#allocation8 + $0x24] sm:$0xf]
    %v269 = vld [vmem:[#allocation8 + $0x28] sm:$0xf]
    %v270 = vld [vmem:[#allocation8 + $0x2c] sm:$0xf]
    %v271 = vld [vmem:[#allocation8 + $0x30] sm:$0xf]
    %v272 = vld [vmem:[#allocation8 + $0x34] sm:$0xf]
    %v273 = vld [vmem:[#allocation8 + $0x38] sm:$0xf]
    %v274 = vld [vmem:[#allocation8 + $0x3c] sm:$0xf]
    %v291 = vunpack.c.l.b16 %v259
    %v292 = vunpack.c.l.b16 %v260
    %v293 = vunpack.c.l.b16 %v261
    %v294 = vunpack.c.l.b16 %v262
    %v295 = vunpack.c.l.b16 %v263
    %v296 = vunpack.c.l.b16 %v264
    %v297 = vunpack.c.l.b16 %v265
    %v298 = vunpack.c.l.b16 %v266
    %v299 = vunpack.c.l.b16 %v267
    %v300 = vunpack.c.l.b16 %v268
    %v301 = vunpack.c.l.b16 %v269
    %v302 = vunpack.c.l.b16 %v270
    %v303 = vunpack.c.l.b16 %v271
    %v304 = vunpack.c.l.b16 %v272
    %v305 = vunpack.c.l.b16 %v273
    %v306 = vunpack.c.l.b16 %v274
    %v307 = vpack.c.b16 %v292, %v291
    %v308 = vpack.c.b16 %v294, %v293
    %v309 = vpack.c.b16 %v296, %v295
    %v310 = vpack.c.b16 %v298, %v297
    %v311 = vpack.c.b16 %v300, %v299
    %v312 = vpack.c.b16 %v302, %v301
    %v313 = vpack.c.b16 %v304, %v303
    %v314 = vpack.c.b16 %v306, %v305
    %323 = vmatpush.bf16.msra.mxu0 %v314
    %324 = vmatpush.bf16.msra.mxu0 %v313
    %325 = vmatpush.bf16.msra.mxu0 %v312
    %326 = vmatpush.bf16.msra.mxu0 %v311
    %327 = vmatpush.bf16.msra.mxu0 %v310
    %328 = vmatpush.bf16.msra.mxu0 %v309
    %329 = vmatpush.bf16.msra.mxu0 %v308
    %330 = vmatpush.bf16.msra.mxu0 %v307
    %331 = vmatmul.bf16.gmra.mxu0 %v258
    %v332 = vpop.f32.mrf.mxu0
    %v333 = vadd.f32 0.0, %v332
    %v334 = vpop.f32.mrf.mxu0
    %v335 = vadd.f32 0.0, %v334
    %336 = vdwg.mxu0
    %v337 = vadd.f32 %v256, %v333
    %v338 = vadd.f32 %v257, %v335
    %339 = vst [vmem:[#allocation2] sm:$0xff] %v337
    %340 = vst [vmem:[#allocation2 + $0x8] sm:$0xff] %v338
    // Predicated region
    $region38: #{tpu_custom_call.1} parent=1 // pred_check
      %p341 = pneg %p68
    $region39: #{tpu_custom_call.1} parent=1 // pred_check_branch
      %343 = sbr.rel (%p341) target = $region41
    $region40: #{tpu_custom_call.1} parent=1 // pred_region
      %v344 = vld [vmem:[#allocation2] sm:$0xff]
      %v345 = vld [vmem:[#allocation2 + $0x8] sm:$0xff]
      %346 = vst [vmem:[#allocation9] sm:$0xff] %v344
      %347 = vst [vmem:[#allocation9 + $0x8] sm:$0xff] %v345
    $region41: #{tpu_custom_call.1} parent=1 // pred_fallthru
      _
    // Predicated region
    $region42: #{tpu_custom_call.1} parent=1 // pred_check
      _
    $region43: #{tpu_custom_call.1} parent=1 // pred_check_branch
      %349 = sbr.rel (0) target = $region45
    $region44: #{tpu_custom_call.1} parent=1 // pred_region
      %351 = vsyncadd [#allocation5], 0
      %s352 = sshll.u32 [#allocation9], 4
      %s353 = int_to_ptr.vmem [resolvable:$true] %s352
      %s354 = sshll.u32 %s5, 4
      %s355 = int_to_ptr.hbm [resolvable:$true] %s354
      %360 = dma.vmem_to_hbm [thread:$0]  %s353, 256, %s355, [#allocation5], 128, 128, 8
    $region45: #{tpu_custom_call.1} parent=1 // pred_fallthru
      _
    // Predicated region
    $region46: #{tpu_custom_call.1} parent=1 // pred_check
      _
    $region47: #{tpu_custom_call.1} parent=1 // pred_check_branch
      %362 = sbr.rel (0) target = $region49
    $region48: #{tpu_custom_call.1} parent=1 // pred_region
      %364 = dma.done [#allocation5], 256
    $region49: #{tpu_custom_call.1} parent=1 // pred_fallthru
      _
    %365 = vsyncpa [#allocation4], 1
    %366 = vsyncpa [#allocation7], 1
    %367 = vsyncpa [#allocation5], 1

</llo_original>
